<compile_context>
chip_gen: v5e
topology: v5e:2x2
jax: 0.10.0
libtpu: 0.0.40
codegen_flags: <defaults>
</compile_context>

<pallas_src>
import functools

import jax
import jax.numpy as jnp
import numpy as np
from jax.experimental import pallas as pl
from jax.experimental.pallas import tpu as pltpu

_LANE = 128


def _sublane_multiple(dtype) -> int:
    return {4: 8, 2: 16, 1: 32}.get(jnp.dtype(dtype).itemsize, 8)


def _embedder_kernel(x_ref, o_ref, *, freqs, include_input, use_doubling):
    # x_ref: (rt, 128) lane-dense slab of the flattened input.
    # o_ref: (C, rt, 128) channel-major slabs, C = include_input + 2*len(freqs).
    x = x_ref[...]
    out_dt = o_ref.dtype
    c = 0
    if include_input:
        o_ref[0] = x.astype(out_dt)          # direct slab store, no concat
        c = 1
    if not freqs:
        return
    xf32 = x.astype(jnp.float32)             # compute trig in f32
    if use_doubling:
        # Exact power-of-two ladder: one sin/cos, then double-angle recurrence.
        theta = xf32 * freqs[0]
        s = jnp.sin(theta)
        co = jnp.cos(theta)
        o_ref[c] = s.astype(out_dt)
        o_ref[c + 1] = co.astype(out_dt)
        c += 2
        for _ in freqs[1:]:
            s, co = 2.0 * s * co, co * co - s * s   # ~3 VPU ops per element
            o_ref[c] = s.astype(out_dt)
            o_ref[c + 1] = co.astype(out_dt)
            c += 2
    else:
        for f in freqs:                      # static floats, fully unrolled
            theta = xf32 * f
            o_ref[c] = jnp.sin(theta).astype(out_dt)
            o_ref[c + 1] = jnp.cos(theta).astype(out_dt)
            c += 2


def embedder_forward(x, freq_bands, *, include_input=True, row_tile=1024,
                     out_dtype=None, channel_major=False):
    """Pallas positional-encoding embedder.

    x:             (..., d) float array
    freq_bands:    static sequence of frequencies
    out_dtype:     optional output dtype (e.g. jnp.bfloat16 halves HBM writes)
    channel_major: if True, return (C, ..., d) slabs (no wrapper transpose);
                   `moveaxis(out, 0, -2).reshape(..., C*d)` recovers the
                   spec-exact layout.  Default False matches the torch module.
    """
    orig_shape = x.shape
    batch = orig_shape[:-1]
    d = int(orig_shape[-1])
    n = int(np.prod(batch)) if batch else 1
    in_dtype = x.dtype
    out_dtype = jnp.dtype(in_dtype if out_dtype is None else out_dtype)

    freqs = tuple(float(f) for f in np.asarray(freq_bands).reshape(-1))
    num_freqs = len(freqs)
    C = (1 if include_input else 0) + 2 * num_freqs
    if C == 0:
        return jnp.zeros((*batch, 0), dtype=out_dtype)

    use_doubling = num_freqs >= 2 and all(
        freqs[i + 1] == 2.0 * freqs[i] for i in range(num_freqs - 1))

    # ---- lane-dense view: flat vector -> (R, 128) -----------------------------
    total = n * d
    total_pad = int(pl.cdiv(total, _LANE)) * _LANE
    x_flat = x.reshape(total)
    if total_pad != total:                 # <=127 extra elems; skipped if aligned
        x_flat = jnp.pad(x_flat, (0, total_pad - total))
    R = total_pad // _LANE
    x2 = x_flat.reshape(R, _LANE)

    # ---- row tile: dtype-aware sublane multiple, >=2 grid steps when possible --
    mult = max(_sublane_multiple(in_dtype), _sublane_multiple(out_dtype))
    if R <= mult:
        rt = R                             # block == full dim, always legal
    else:
        rt = min(int(row_tile), R)
        half = ((((R + 1) // 2) + mult - 1) // mult) * mult
        rt = min(rt, half)                 # keep >=2 steps for v7x megacore
        rt = max(mult, (rt // mult) * mult)
    grid = (int(pl.cdiv(R, rt)),)

    # ---- VMEM budget: raise scoped limit only when the default is too small ---
    in_item = jnp.dtype(in_dtype).itemsize
    out_item = out_dtype.itemsize
    block_bytes = rt * _LANE * (2 * in_item + 2 * C * out_item + 4 * 4)
    vmem_limit = None
    if block_bytes > (14 << 20):
        vmem_limit = int(min(block_bytes + (4 << 20), 110 << 20))

    kernel = functools.partial(_embedder_kernel, freqs=freqs,
                               include_input=include_input,
                               use_doubling=use_doubling)

    out_cmr = pl.pallas_call(
        kernel,
        out_shape=jax.ShapeDtypeStruct((C, R, _LANE), out_dtype),
        grid=grid,
        in_specs=[pl.BlockSpec((rt, _LANE), lambda i: (i, 0))],
        out_specs=pl.BlockSpec((C, rt, _LANE), lambda i: (0, i, 0)),
        compiler_params=pltpu.CompilerParams(
            dimension_semantics=("parallel",),
            vmem_limit_bytes=vmem_limit),
    )(x2)

    out_cm = out_cmr.reshape(C, total_pad)[:, :total].reshape(C, n, d)
    if channel_major:
        # Fast path: no transpose; consumer permutes its weight rows instead.
        return out_cm.reshape((C, *batch, d))
    # Spec-exact interleave (..., C*d).  Under jit this permutation can fuse
    # into the consumer's operand read; standalone it is one extra HBM pass.
    return jnp.moveaxis(out_cm, 0, 1).reshape(*batch, C * d)


def make_freq_bands(num_freqs, max_freq_log2, log_sampling=True):
    if log_sampling:
        return 2.0 ** np.linspace(0.0, float(max_freq_log2), num_freqs)
    return np.linspace(2.0 ** 0.0, 2.0 ** float(max_freq_log2), num_freqs)


if __name__ == "__main__":
    d = 3                        # input_dims
    num_freqs = 4                # num_freqs
    max_freq_log2 = num_freqs - 1
    include_input = True
    C = 1 + 2 * num_freqs

    def reference(x, fb):
        parts = [x] if include_input else []
        for f in fb:
            parts.append(jnp.sin(x * jnp.float32(f)))
            parts.append(jnp.cos(x * jnp.float32(f)))
        return jnp.concatenate(parts, axis=-1)

    key = jax.random.PRNGKey(0)

    # Test 1: log-sampled bands (power-of-two ladder -> doubling recurrence).
    fb_log = make_freq_bands(num_freqs, max_freq_log2, log_sampling=True)
    x1 = jax.random.normal(key, (2, 8, d), dtype=jnp.float32)
    out1 = jax.block_until_ready(
        embedder_forward(x1, fb_log, include_input=include_input))
    ref1 = reference(x1, fb_log)
    assert out1.shape == ref1.shape == (2, 8, d * C)
    np.testing.assert_allclose(np.asarray(out1), np.asarray(ref1),
                               rtol=1e-4, atol=1e-4)

    # Test 2: multi-step grid with a ragged last row block
    # (n*d = 2160 -> R = 17 rows, row_tile=16 -> 2 blocks, last one partial).
    x2 = jax.random.normal(jax.random.PRNGKey(1), (6, 120, d), dtype=jnp.float32)
    out2 = jax.block_until_ready(
        embedder_forward(x2, fb_log, include_input=include_input, row_tile=16))
    ref2 = reference(x2, fb_log)
    np.testing.assert_allclose(np.asarray(out2), np.asarray(ref2),
                               rtol=1e-4, atol=1e-4)

    # Test 3: linear-sampled bands (not a doubling ladder) -> direct sin/cos path.
    fb_lin = make_freq_bands(num_freqs, max_freq_log2, log_sampling=False)
    out3 = jax.block_until_ready(
        embedder_forward(x1, fb_lin, include_input=include_input))
    ref3 = reference(x1, fb_lin)
    np.testing.assert_allclose(np.asarray(out3), np.asarray(ref3),
                               rtol=1e-4, atol=1e-4)

    # Test 4: opt-in bf16 output slabs (halved HBM write traffic).
    out4 = jax.block_until_ready(
        embedder_forward(x1, fb_log, include_input=include_input,
                         out_dtype=jnp.bfloat16))
    np.testing.assert_allclose(np.asarray(out4.astype(jnp.float32)),
                               np.asarray(ref1), rtol=2e-2, atol=2e-2)

    # Test 5: channel-major fast path (no wrapper transpose) is a pure
    # permutation of the spec output.
    out5 = jax.block_until_ready(
        embedder_forward(x1, fb_log, include_input=include_input,
                         channel_major=True))
    assert out5.shape == (C, 2, 8, d)
    np.testing.assert_allclose(
        np.asarray(jnp.moveaxis(out5, 0, -2).reshape(2, 8, C * d)),
        np.asarray(ref1), rtol=1e-4, atol=1e-4)

    print("KERNEL_OK")
</pallas_src>

<mosaic_0001>
module attributes {stable_mosaic.version = 11 : i64} {
  func.func @_embedder_kernel(%arg0: i32, %arg1: memref<1x128xf32, #tpu.memory_space<vmem>>, %arg2: memref<9x1x128xf32, #tpu.memory_space<vmem>>) attributes {dimension_semantics = [#tpu.dimension_semantics<parallel>], iteration_bounds = array<i64: 1>, scalar_prefetch = 0 : i64, scratch_operands = 0 : i64, tpu.core_type = #tpu.core_type<tc>, window_params = [{transform_indices = @transform_0, window_bounds = array<i64: 1, 128>}, {transform_indices = @transform_1, window_bounds = array<i64: 9, 1, 128>}]} {
    %c0 = arith.constant 0 : index
    %c0_0 = arith.constant 0 : index
    %0 = vector.load %arg1[%c0, %c0_0] : memref<1x128xf32, #tpu.memory_space<vmem>>, vector<1x128xf32>
    %c0_1 = arith.constant 0 : index
    %c0_2 = arith.constant 0 : index
    %c0_3 = arith.constant 0 : index
    %1 = vector.load %arg2[%c0_1, %c0_2, %c0_3] : memref<9x1x128xf32, #tpu.memory_space<vmem>>, vector<1x1x128xf32>
    %2 = vector.shape_cast %1 : vector<1x1x128xf32> to vector<1x128xf32>
    %3 = vector.shape_cast %0 : vector<1x128xf32> to vector<1x1x128xf32>
    tpu.vector_store %arg2[%c0_1, %c0_2, %c0_3], %3 {strides = array<i32>} : memref<9x1x128xf32, #tpu.memory_space<vmem>>, vector<1x1x128xf32>,
    %cst = arith.constant 1.000000e+00 : f32
    %4 = vector.broadcast %cst : f32 to vector<1x128xf32>
    %5 = arith.mulf %0, %4 : vector<1x128xf32>
    %6 = math.sin %5 : vector<1x128xf32>
    %7 = math.cos %5 : vector<1x128xf32>
    %c1 = arith.constant 1 : index
    %c0_4 = arith.constant 0 : index
    %c0_5 = arith.constant 0 : index
    %8 = vector.load %arg2[%c1, %c0_4, %c0_5] : memref<9x1x128xf32, #tpu.memory_space<vmem>>, vector<1x1x128xf32>
    %9 = vector.shape_cast %8 : vector<1x1x128xf32> to vector<1x128xf32>
    %10 = vector.shape_cast %6 : vector<1x128xf32> to vector<1x1x128xf32>
    tpu.vector_store %arg2[%c1, %c0_4, %c0_5], %10 {strides = array<i32>} : memref<9x1x128xf32, #tpu.memory_space<vmem>>, vector<1x1x128xf32>,
    %c2 = arith.constant 2 : index
    %c0_6 = arith.constant 0 : index
    %c0_7 = arith.constant 0 : index
    %11 = vector.load %arg2[%c2, %c0_6, %c0_7] : memref<9x1x128xf32, #tpu.memory_space<vmem>>, vector<1x1x128xf32>
    %12 = vector.shape_cast %11 : vector<1x1x128xf32> to vector<1x128xf32>
    %13 = vector.shape_cast %7 : vector<1x128xf32> to vector<1x1x128xf32>
    tpu.vector_store %arg2[%c2, %c0_6, %c0_7], %13 {strides = array<i32>} : memref<9x1x128xf32, #tpu.memory_space<vmem>>, vector<1x1x128xf32>,
    %cst_8 = arith.constant 2.000000e+00 : f32
    %14 = vector.broadcast %cst_8 : f32 to vector<1x128xf32>
    %15 = arith.mulf %14, %6 : vector<1x128xf32>
    %16 = arith.mulf %15, %7 : vector<1x128xf32>
    %17 = arith.mulf %7, %7 : vector<1x128xf32>
    %18 = arith.mulf %6, %6 : vector<1x128xf32>
    %19 = arith.subf %17, %18 : vector<1x128xf32>
    %c3 = arith.constant 3 : index
    %c0_9 = arith.constant 0 : index
    %c0_10 = arith.constant 0 : index
    %20 = vector.load %arg2[%c3, %c0_9, %c0_10] : memref<9x1x128xf32, #tpu.memory_space<vmem>>, vector<1x1x128xf32>
    %21 = vector.shape_cast %20 : vector<1x1x128xf32> to vector<1x128xf32>
    %22 = vector.shape_cast %16 : vector<1x128xf32> to vector<1x1x128xf32>
    tpu.vector_store %arg2[%c3, %c0_9, %c0_10], %22 {strides = array<i32>} : memref<9x1x128xf32, #tpu.memory_space<vmem>>, vector<1x1x128xf32>,
    %c4 = arith.constant 4 : index
    %c0_11 = arith.constant 0 : index
    %c0_12 = arith.constant 0 : index
    %23 = vector.load %arg2[%c4, %c0_11, %c0_12] : memref<9x1x128xf32, #tpu.memory_space<vmem>>, vector<1x1x128xf32>
    %24 = vector.shape_cast %23 : vector<1x1x128xf32> to vector<1x128xf32>
    %25 = vector.shape_cast %19 : vector<1x128xf32> to vector<1x1x128xf32>
    tpu.vector_store %arg2[%c4, %c0_11, %c0_12], %25 {strides = array<i32>} : memref<9x1x128xf32, #tpu.memory_space<vmem>>, vector<1x1x128xf32>,
    %cst_13 = arith.constant 2.000000e+00 : f32
    %26 = vector.broadcast %cst_13 : f32 to vector<1x128xf32>
    %27 = arith.mulf %26, %16 : vector<1x128xf32>
    %28 = arith.mulf %27, %19 : vector<1x128xf32>
    %29 = arith.mulf %19, %19 : vector<1x128xf32>
    %30 = arith.mulf %16, %16 : vector<1x128xf32>
    %31 = arith.subf %29, %30 : vector<1x128xf32>
    %c5 = arith.constant 5 : index
    %c0_14 = arith.constant 0 : index
    %c0_15 = arith.constant 0 : index
    %32 = vector.load %arg2[%c5, %c0_14, %c0_15] : memref<9x1x128xf32, #tpu.memory_space<vmem>>, vector<1x1x128xf32>
    %33 = vector.shape_cast %32 : vector<1x1x128xf32> to vector<1x128xf32>
    %34 = vector.shape_cast %28 : vector<1x128xf32> to vector<1x1x128xf32>
    tpu.vector_store %arg2[%c5, %c0_14, %c0_15], %34 {strides = array<i32>} : memref<9x1x128xf32, #tpu.memory_space<vmem>>, vector<1x1x128xf32>,
    %c6 = arith.constant 6 : index
    %c0_16 = arith.constant 0 : index
    %c0_17 = arith.constant 0 : index
    %35 = vector.load %arg2[%c6, %c0_16, %c0_17] : memref<9x1x128xf32, #tpu.memory_space<vmem>>, vector<1x1x128xf32>
    %36 = vector.shape_cast %35 : vector<1x1x128xf32> to vector<1x128xf32>
    %37 = vector.shape_cast %31 : vector<1x128xf32> to vector<1x1x128xf32>
    tpu.vector_store %arg2[%c6, %c0_16, %c0_17], %37 {strides = array<i32>} : memref<9x1x128xf32, #tpu.memory_space<vmem>>, vector<1x1x128xf32>,
    %cst_18 = arith.constant 2.000000e+00 : f32
    %38 = vector.broadcast %cst_18 : f32 to vector<1x128xf32>
    %39 = arith.mulf %38, %28 : vector<1x128xf32>
    %40 = arith.mulf %39, %31 : vector<1x128xf32>
    %41 = arith.mulf %31, %31 : vector<1x128xf32>
    %42 = arith.mulf %28, %28 : vector<1x128xf32>
    %43 = arith.subf %41, %42 : vector<1x128xf32>
    %c7 = arith.constant 7 : index
    %c0_19 = arith.constant 0 : index
    %c0_20 = arith.constant 0 : index
    %44 = vector.load %arg2[%c7, %c0_19, %c0_20] : memref<9x1x128xf32, #tpu.memory_space<vmem>>, vector<1x1x128xf32>
    %45 = vector.shape_cast %44 : vector<1x1x128xf32> to vector<1x128xf32>
    %46 = vector.shape_cast %40 : vector<1x128xf32> to vector<1x1x128xf32>
    tpu.vector_store %arg2[%c7, %c0_19, %c0_20], %46 {strides = array<i32>} : memref<9x1x128xf32, #tpu.memory_space<vmem>>, vector<1x1x128xf32>,
    %c8 = arith.constant 8 : index
    %c0_21 = arith.constant 0 : index
    %c0_22 = arith.constant 0 : index
    %47 = vector.load %arg2[%c8, %c0_21, %c0_22] : memref<9x1x128xf32, #tpu.memory_space<vmem>>, vector<1x1x128xf32>
    %48 = vector.shape_cast %47 : vector<1x1x128xf32> to vector<1x128xf32>
    %49 = vector.shape_cast %43 : vector<1x128xf32> to vector<1x1x128xf32>
    tpu.vector_store %arg2[%c8, %c0_21, %c0_22], %49 {strides = array<i32>} : memref<9x1x128xf32, #tpu.memory_space<vmem>>, vector<1x1x128xf32>,
    return
  }
  func.func @transform_0(%arg0: i32) -> (i32, i32) {
    %c0_i32 = arith.constant 0 : i32
    %c0_i32_0 = arith.constant 0 : i32
    return %arg0, %c0_i32 : i32, i32
  }
  func.func @transform_1(%arg0: i32) -> (i32, i32, i32) {
    %c0_i32 = arith.constant 0 : i32
    %c0_i32_0 = arith.constant 0 : i32
    %c0_i32_1 = arith.constant 0 : i32
    return %c0_i32, %arg0, %c0_i32_0 : i32, i32, i32
  }
}

</mosaic_0001>

<llo_original>
// kernel: tpu_custom_call.1
$region0: #{tpu_custom_call.1}
  #allocation0 [shape = 'u32[]', space=smem, size = 0x4, offset = 0x4, fixed_abs, tag = 'smem constant byte address 0x4 - core index']
  #allocation1 [shape = 'u32[72,128]{1,0:T(1,128)}', space=vmem, size = 0x9000, scoped, tag = 'internal scratch']
  %s0 = inlined_call_operand.hbm [shape: f32[1,128], index: 0, kind: input, shape index: {}]
  %s1 = inlined_call_operand.hbm [shape: f32[9,1,128], index: 1, kind: output, shape index: {}]
  %s2 = sld [smem:[#allocation0]]
  $region18: #{tpu_custom_call.1} parent=0
    _
  %s4 = ssub.s32 1, %s2
  %s5 = scalar_select 0, %s4, %s2
  $region1: #{tpu_custom_call.1} parent=0
    #allocation2 [shape = 'u8[512]{0}', space=vmem, size = 0x400, scoped, tag = 'input window, operand 0, single buffered']
    #allocation3 [shape = 's32[1]{0}', space=sflag, size = 0x4, scoped, tag = 'scoped memory for tpu_custom_call.1']
    #allocation4 [shape = 's32[1]{0}', space=sflag, size = 0x4, scoped, tag = 'scoped memory for tpu_custom_call.1']
    #allocation5 [shape = 'u8[4608]{0}', space=vmem, size = 0x1400, scoped, tag = 'output window, operand 0, single buffered']
    %6 = vsyncpa [#allocation3], 0
    %7 = vsyncpa [#allocation4], 0
    // Predicated region
    $region2: #{tpu_custom_call.1} parent=1 // pred_check
      _
    $region3: #{tpu_custom_call.1} parent=1 // pred_check_branch
      %9 = sbr.rel (0) target = $region5
    $region4: #{tpu_custom_call.1} parent=1 // pred_region
      %11 = vsyncadd [#allocation3], 0
      %s13 = sshll.u32 %s0, 4
      %s14 = int_to_ptr.hbm [resolvable:$true] %s13
      %s15 = sshll.u32 [#allocation2], 4
      %s16 = int_to_ptr.vmem [resolvable:$true] %s15
      %18 = dma.hbm_to_vmem [thread:$0]  %s14, 16, %s16, [#allocation3]
    $region5: #{tpu_custom_call.1} parent=1 // pred_fallthru
      _
    // Predicated region
    $region6: #{tpu_custom_call.1} parent=1 // pred_check
      _
    $region7: #{tpu_custom_call.1} parent=1 // pred_check_branch
      %20 = sbr.rel (0) target = $region9
    $region8: #{tpu_custom_call.1} parent=1 // pred_region
      %22 = dma.done [#allocation3], 16
    $region9: #{tpu_custom_call.1} parent=1 // pred_fallthru
      _
    %v23 = vld [vmem:[#allocation2] sm:$0x1]
    %24 = vst [vmem:[#allocation5] sm:$0x1] %v23
    %v25 = vand.u32 2147483647, %v23
    %vm26 = vcmp.le.f32.partialorder %v25, 0.7853982
    %vm27 = vcmp.lt.s32.totalorder %v23, 0
    %v28 = vand.u32 %v23, 2139095040
    %v29 = vshrl.u32 %v28, 23
    %v30 = vsub.s32 %v29, 127
    %v31 = vand.u32 2147483647, %v23
    %v32 = vand.u32 %v31, 8388607
    %v33 = vor.u32 %v32, 8388608
    %v34 = vsub.s32 0, %v33
    %v35 = vadd.s32 %v30, 1
    %vm36 = vcmp.gt.s32.totalorder %v35, 0
    %v37 = vsel %vm36, %v35, 0
    %v38 = vshrl.u32 %v37, 5
    %v39 = vand.u32 %v37, 31
    %v40 = vsub.s32 32, %v39
    %v41 = vshrl.u32 683565275, %v40
    %v42 = vshll.u32 683565275, %v39
    %v43 = vshrl.u32 2475754826, %v40
    %v44 = vor.u32 %v42, %v43
    %v45 = vshll.u32 2475754826, %v39
    %v46 = vshrl.u32 2131351028, %v40
    %v47 = vor.u32 %v45, %v46
    %v48 = vshll.u32 2131351028, %v39
    %v49 = vshrl.u32 2102212464, %v40
    %v50 = vor.u32 %v48, %v49
    %v51 = vshll.u32 2102212464, %v39
    %v52 = vshrl.u32 920167782, %v40
    %v53 = vor.u32 %v51, %v52
    %v54 = vshll.u32 920167782, %v39
    %v55 = vshrl.u32 1326507024, %v40
    %v56 = vor.u32 %v54, %v55
    %vm57 = vcmp.lt.s32.totalorder %v38, 1
    %vm58 = vcmp.lt.s32.totalorder %v38, 2
    %vm59 = vcmp.lt.s32.totalorder %v38, 3
    %vm60 = vcmp.lt.s32.totalorder %v38, 4
    %v61 = vsel %vm57, %v41, %v44
    %v62 = vsel %vm60, %v50, 2102212464
    %v63 = vsel %vm59, %v47, %v62
    %v64 = vsel %vm58, %v61, %v63
    %v65 = vsel %vm57, %v44, %v47
    %v66 = vsel %vm60, %v53, 920167782
    %v67 = vsel %vm59, %v50, %v66
    %v68 = vsel %vm58, %v65, %v67
    %v69 = vsel %vm57, %v47, %v50
    %v70 = vsel %vm60, %v56, 1326507024
    %v71 = vsel %vm59, %v53, %v70
    %v72 = vsel %vm58, %v69, %v71
    %v73 = vshll.u32 %v33, 8
    %v74 = vand.u32 %v73, 65535
    %v75 = vshrl.u32 %v73, 16
    %v76 = vand.u32 %v72, 65535
    %v77 = vshrl.u32 %v72, 16
    %v78 = vmul.u32 %v74, %v76
    %v79 = vmul.u32 %v74, %v77
    %v80 = vmul.u32 %v75, %v76
    %v81 = vmul.u32 %v75, %v77
    %v82 = vshll.u32 %v79, 16
    %v83 = vshrl.u32 %v79, 16
    %v84 = vshll.u32 %v80, 16
    %v85 = vshrl.u32 %v80, 16
    %vm86 = vc.u32 %v78, %v82
    %v87 = vsel %vm86, 1, 0
    %v88 = vadd.s32 %v78, %v82
    %v89 = vadd.s32 %v81, %v87
    %vm90 = vc.u32 %v88, %v84
    %v91 = vsel %vm90, 1, 0
    %v92 = vadd.s32 %v88, %v84
    %v93 = vadd.s32 %v89, %v91
    %v94 = vadd.s32 %v93, %v83
    %v95 = vadd.s32 %v94, %v85
    %v96 = vand.u32 %v73, 65535
    %v97 = vshrl.u32 %v73, 16
    %v98 = vand.u32 %v68, 65535
    %v99 = vshrl.u32 %v68, 16
    %v100 = vmul.u32 %v96, %v98
    %v101 = vmul.u32 %v96, %v99
    %v102 = vmul.u32 %v97, %v98
    %v103 = vmul.u32 %v97, %v99
    %v104 = vshll.u32 %v101, 16
    %v105 = vshrl.u32 %v101, 16
    %v106 = vshll.u32 %v102, 16
    %v107 = vshrl.u32 %v102, 16
    %vm108 = vc.u32 %v100, %v104
    %v109 = vsel %vm108, 1, 0
    %v110 = vadd.s32 %v100, %v104
    %v111 = vadd.s32 %v103, %v109
    %vm112 = vc.u32 %v110, %v106
    %v113 = vsel %vm112, 1, 0
    %v114 = vadd.s32 %v110, %v106
    %v115 = vadd.s32 %v111, %v113
    %v116 = vadd.s32 %v115, %v105
    %v117 = vadd.s32 %v116, %v107
    %v118 = vmul.u32 %v73, %v64
    %v119 = vadd.s32 %v95, %v114
    %vm120 = vc.u32 %v95, %v114
    %v121 = vadd.s32 %v117, 1
    %v122 = vsel %vm120, %v121, %v117
    %v123 = vadd.s32 %v118, %v122
    %v124 = vadd.s32 %v123, 536870912
    %v125 = vshrl.u32 %v124, 30
    %v126 = vshll.u32 %v125, 30
    %v127 = vsub.s32 %v123, %v126
    %vm128 = vcmp.lt.s32.totalorder %v127, 0
    %v129 = vsub.s32 0, %v127
    %v130 = vsel %vm128, %v129, %v127
    %v131 = vclz %v130
    %v132 = vsub.s32 %v131, 2
    %vm133 = vcmp.gt.s32.totalorder 0, %v132
    %v134 = vsel %vm133, 0, %v132
    %v135 = vsub.s32 32, %v134
    %v136 = vshll.u32 %v127, %v134
    %v137 = vshrl.u32 %v119, %v135
    %v138 = vor.u32 %v136, %v137
    %v139 = vsub.s32 4294967266, %v134
    %v140 = vadd.s32 %v139, 127
    %v141 = vshll.u32 %v140, 23
    %v142 = vor.u32 4788187, %v141
    %v143 = vand.u32 2147483647, %v142
    %v145 = vcvt.s32.f32 %v138
    %v146 = vmul.f32 %v145, %v143
    %v147 = vxor.u32 %v146, 2147483648
    %v148 = vsel %vm27, %v147, %v146
    %v149 = vsub.s32 4, %v125
    %v150 = vsel %vm27, %v149, %v125
    %v151 = vsel %vm26, %v23, %v148
    %v152 = vsel %vm26, 0, %v150
    %v153 = vmul.f32 %v151, %v151
    %v154 = vmul.f32 %v153, -0.001358992
    %v155 = vadd.f32 %v154, 0.041655596
    %v156 = vmul.f32 %v153, %v155
    %v157 = vadd.f32 %v156, -0.4999988
    %v158 = vmul.f32 %v153, %v157
    %v159 = vadd.f32 1.0, %v158
    %v160 = vmul.f32 %v151, %v151
    %v161 = vmul.f32 %v160, -0.00019511016
    %v162 = vadd.f32 %v161, 0.008332121
    %v163 = vmul.f32 %v160, %v162
    %v164 = vadd.f32 %v163, -0.16666654
    %v165 = vmul.f32 %v160, %v164
    %v166 = vadd.f32 %v165, 1.0
    %v167 = vmul.f32 %v166, %v151
    %vm168 = vweird.f32 %v23
    %v169 = vadd.s32 %v152, 3
    %v170 = vand.u32 %v169, 3
    %vm171 = vcmp.lt.s32.totalorder %v170, 2
    %vm172 = vcmp.eq.s32.totalorder %v170, 0
    %v173 = vxor.u32 %v167, 2147483648
    %v174 = vsel %vm172, %v159, %v173
    %vm175 = vcmp.eq.s32.totalorder %v170, 2
    %v176 = vxor.u32 %v159, 2147483648
    %v177 = vsel %vm175, %v176, %v167
    %v178 = vsel %vm171, %v174, %v177
    %v179 = vsel %vm168, nan, %v178
    %v180 = vand.u32 2147483647, %v23
    %vm181 = vcmp.le.f32.partialorder %v180, 0.7853982
    %vm182 = vcmp.lt.s32.totalorder %v23, 0
    %v183 = vand.u32 %v23, 2139095040
    %v184 = vshrl.u32 %v183, 23
    %v185 = vsub.s32 %v184, 127
    %v186 = vand.u32 2147483647, %v23
    %v187 = vand.u32 %v186, 8388607
    %v188 = vor.u32 %v187, 8388608
    %v189 = vsub.s32 0, %v188
    %v190 = vadd.s32 %v185, 1
    %vm191 = vcmp.gt.s32.totalorder %v190, 0
    %v192 = vsel %vm191, %v190, 0
    %v193 = vshrl.u32 %v192, 5
    %v194 = vand.u32 %v192, 31
    %v195 = vsub.s32 32, %v194
    %v196 = vshrl.u32 683565275, %v195
    %v197 = vshll.u32 683565275, %v194
    %v198 = vshrl.u32 2475754826, %v195
    %v199 = vor.u32 %v197, %v198
    %v200 = vshll.u32 2475754826, %v194
    %v201 = vshrl.u32 2131351028, %v195
    %v202 = vor.u32 %v200, %v201
    %v203 = vshll.u32 2131351028, %v194
    %v204 = vshrl.u32 2102212464, %v195
    %v205 = vor.u32 %v203, %v204
    %v206 = vshll.u32 2102212464, %v194
    %v207 = vshrl.u32 920167782, %v195
    %v208 = vor.u32 %v206, %v207
    %v209 = vshll.u32 920167782, %v194
    %v210 = vshrl.u32 1326507024, %v195
    %v211 = vor.u32 %v209, %v210
    %vm212 = vcmp.lt.s32.totalorder %v193, 1
    %vm213 = vcmp.lt.s32.totalorder %v193, 2
    %vm214 = vcmp.lt.s32.totalorder %v193, 3
    %vm215 = vcmp.lt.s32.totalorder %v193, 4
    %v216 = vsel %vm212, %v196, %v199
    %v217 = vsel %vm215, %v205, 2102212464
    %v218 = vsel %vm214, %v202, %v217
    %v219 = vsel %vm213, %v216, %v218
    %v220 = vsel %vm212, %v199, %v202
    %v221 = vsel %vm215, %v208, 920167782
    %v222 = vsel %vm214, %v205, %v221
    %v223 = vsel %vm213, %v220, %v222
    %v224 = vsel %vm212, %v202, %v205
    %v225 = vsel %vm215, %v211, 1326507024
    %v226 = vsel %vm214, %v208, %v225
    %v227 = vsel %vm213, %v224, %v226
    %v228 = vshll.u32 %v188, 8
    %v229 = vand.u32 %v228, 65535
    %v230 = vshrl.u32 %v228, 16
    %v231 = vand.u32 %v227, 65535
    %v232 = vshrl.u32 %v227, 16
    %v233 = vmul.u32 %v229, %v231
    %v234 = vmul.u32 %v229, %v232
    %v235 = vmul.u32 %v230, %v231
    %v236 = vmul.u32 %v230, %v232
    %v237 = vshll.u32 %v234, 16
    %v238 = vshrl.u32 %v234, 16
    %v239 = vshll.u32 %v235, 16
    %v240 = vshrl.u32 %v235, 16
    %vm241 = vc.u32 %v233, %v237
    %v242 = vsel %vm241, 1, 0
    %v243 = vadd.s32 %v233, %v237
    %v244 = vadd.s32 %v236, %v242
    %vm245 = vc.u32 %v243, %v239
    %v246 = vsel %vm245, 1, 0
    %v247 = vadd.s32 %v243, %v239
    %v248 = vadd.s32 %v244, %v246
    %v249 = vadd.s32 %v248, %v238
    %v250 = vadd.s32 %v249, %v240
    %v251 = vand.u32 %v228, 65535
    %v252 = vshrl.u32 %v228, 16
    %v253 = vand.u32 %v223, 65535
    %v254 = vshrl.u32 %v223, 16
    %v255 = vmul.u32 %v251, %v253
    %v256 = vmul.u32 %v251, %v254
    %v257 = vmul.u32 %v252, %v253
    %v258 = vmul.u32 %v252, %v254
    %v259 = vshll.u32 %v256, 16
    %v260 = vshrl.u32 %v256, 16
    %v261 = vshll.u32 %v257, 16
    %v262 = vshrl.u32 %v257, 16
    %vm263 = vc.u32 %v255, %v259
    %v264 = vsel %vm263, 1, 0
    %v265 = vadd.s32 %v255, %v259
    %v266 = vadd.s32 %v258, %v264
    %vm267 = vc.u32 %v265, %v261
    %v268 = vsel %vm267, 1, 0
    %v269 = vadd.s32 %v265, %v261
    %v270 = vadd.s32 %v266, %v268
    %v271 = vadd.s32 %v270, %v260
    %v272 = vadd.s32 %v271, %v262
    %v273 = vmul.u32 %v228, %v219
    %v274 = vadd.s32 %v250, %v269
    %vm275 = vc.u32 %v250, %v269
    %v276 = vadd.s32 %v272, 1
    %v277 = vsel %vm275, %v276, %v272
    %v278 = vadd.s32 %v273, %v277
    %v279 = vadd.s32 %v278, 536870912
    %v280 = vshrl.u32 %v279, 30
    %v281 = vshll.u32 %v280, 30
    %v282 = vsub.s32 %v278, %v281
    %vm283 = vcmp.lt.s32.totalorder %v282, 0
    %v284 = vsub.s32 0, %v282
    %v285 = vsel %vm283, %v284, %v282
    %v286 = vclz %v285
    %v287 = vsub.s32 %v286, 2
    %vm288 = vcmp.gt.s32.totalorder 0, %v287
    %v289 = vsel %vm288, 0, %v287
    %v290 = vsub.s32 32, %v289
    %v291 = vshll.u32 %v282, %v289
    %v292 = vshrl.u32 %v274, %v290
    %v293 = vor.u32 %v291, %v292
    %v294 = vsub.s32 4294967266, %v289
    %v295 = vadd.s32 %v294, 127
    %v296 = vshll.u32 %v295, 23
    %v297 = vor.u32 4788187, %v296
    %v298 = vand.u32 2147483647, %v297
    %v300 = vcvt.s32.f32 %v293
    %v301 = vmul.f32 %v300, %v298
    %v302 = vxor.u32 %v301, 2147483648
    %v303 = vsel %vm182, %v302, %v301
    %v304 = vsub.s32 4, %v280
    %v305 = vsel %vm182, %v304, %v280
    %v306 = vsel %vm181, %v23, %v303
    %v307 = vsel %vm181, 0, %v305
    %v308 = vmul.f32 %v306, %v306
    %v309 = vmul.f32 %v308, -0.001358992
    %v310 = vadd.f32 %v309, 0.041655596
    %v311 = vmul.f32 %v308, %v310
    %v312 = vadd.f32 %v311, -0.4999988
    %v313 = vmul.f32 %v308, %v312
    %v314 = vadd.f32 1.0, %v313
    %v315 = vmul.f32 %v306, %v306
    %v316 = vmul.f32 %v315, -0.00019511016
    %v317 = vadd.f32 %v316, 0.008332121
    %v318 = vmul.f32 %v315, %v317
    %v319 = vadd.f32 %v318, -0.16666654
    %v320 = vmul.f32 %v315, %v319
    %v321 = vadd.f32 %v320, 1.0
    %v322 = vmul.f32 %v321, %v306
    %vm323 = vweird.f32 %v23
    %v324 = vand.u32 %v307, 3
    %vm325 = vcmp.lt.s32.totalorder %v324, 2
    %vm326 = vcmp.eq.s32.totalorder %v324, 0
    %v327 = vxor.u32 %v322, 2147483648
    %v328 = vsel %vm326, %v314, %v327
    %vm329 = vcmp.eq.s32.totalorder %v324, 2
    %v330 = vxor.u32 %v314, 2147483648
    %v331 = vsel %vm329, %v330, %v322
    %v332 = vsel %vm325, %v328, %v331
    %v333 = vsel %vm323, nan, %v332
    %s334 = scalar_lea.vmem [#allocation5], 1
    %335 = vst [vmem:[%s334] sm:$0x1] %v179
    %s336 = scalar_lea.vmem [#allocation5], 2
    %337 = vst [vmem:[%s336] sm:$0x1] %v333
    %v338 = vmul.f32 %v179, 2.0
    %v339 = vmul.f32 %v338, %v333
    %v340 = vmul.f32 %v333, %v333
    %v341 = vmul.f32 %v179, %v179
    %v342 = vsub.f32 %v340, %v341
    %s343 = scalar_lea.vmem [#allocation5], 3
    %344 = vst [vmem:[%s343] sm:$0x1] %v339
    %s345 = scalar_lea.vmem [#allocation5], 4
    %346 = vst [vmem:[%s345] sm:$0x1] %v342
    %v347 = vmul.f32 %v339, 2.0
    %v348 = vmul.f32 %v347, %v342
    %v349 = vmul.f32 %v342, %v342
    %v350 = vmul.f32 %v339, %v339
    %v351 = vsub.f32 %v349, %v350
    %s352 = scalar_lea.vmem [#allocation5], 5
    %353 = vst [vmem:[%s352] sm:$0x1] %v348
    %s354 = scalar_lea.vmem [#allocation5], 6
    %355 = vst [vmem:[%s354] sm:$0x1] %v351
    %v356 = vmul.f32 %v348, 2.0
    %v357 = vmul.f32 %v356, %v351
    %v358 = vmul.f32 %v351, %v351
    %v359 = vmul.f32 %v348, %v348
    %v360 = vsub.f32 %v358, %v359
    %s361 = scalar_lea.vmem [#allocation5], 7
    %362 = vst [vmem:[%s361] sm:$0x1] %v357
    %s363 = scalar_lea.vmem [#allocation5], 8
    %364 = vst [vmem:[%s363] sm:$0x1] %v360
    // Predicated region
    $region10: #{tpu_custom_call.1} parent=1 // pred_check
      _
    $region11: #{tpu_custom_call.1} parent=1 // pred_check_branch
      %366 = sbr.rel (0) target = $region13
    $region12: #{tpu_custom_call.1} parent=1 // pred_region
      %368 = vsyncadd [#allocation4], 0
      %s369 = sshll.u32 [#allocation5], 4
      %s370 = int_to_ptr.vmem [resolvable:$true] %s369
      %s371 = sshll.u32 %s1, 4
      %s372 = int_to_ptr.hbm [resolvable:$true] %s371
      %377 = dma.vmem_to_hbm [thread:$0]  %s370, 144, %s372, [#allocation4], 16, 16, 1
    $region13: #{tpu_custom_call.1} parent=1 // pred_fallthru
      _
    // Predicated region
    $region14: #{tpu_custom_call.1} parent=1 // pred_check
      _
    $region15: #{tpu_custom_call.1} parent=1 // pred_check_branch
      %379 = sbr.rel (0) target = $region17
    $region16: #{tpu_custom_call.1} parent=1 // pred_region
      %381 = dma.done [#allocation4], 144
    $region17: #{tpu_custom_call.1} parent=1 // pred_fallthru
      _
    %382 = vsyncpa [#allocation3], 1
    %383 = vsyncpa [#allocation4], 1

</llo_original>
